<compile_context>
chip_gen: v7x
topology: tpu7x:2x2x1
jax: 0.10.0
libtpu: 0.0.40
codegen_flags: <defaults>
</compile_context>

<pallas_src>
import functools

import jax
import jax.numpy as jnp
from jax.experimental import pallas as pl
from jax.experimental.pallas import tpu as pltpu


def _round_up(x, m):
    return (x + m - 1) // m * m


# ----------------------------------------------------------------------------
# Pallas kernel: im2col-in-VMEM -> single MXU dot -> bias add -> optional ReLU
# ----------------------------------------------------------------------------
def _conv_bn_relu_kernel(x_ref, w_ref, b_ref, o_ref, *scratch,
                         k, cin_p, wp, l_pad, apply_relu):
    # x_ref : (Cin_p, Lp_total)      compute-dtype padded NCHW-flat input (1 batch)
    # w_ref : (Cout, k*k*Cin_p)      BN-folded weights, tap-major columns
    # b_ref : (Cout, 1)  f32         BN bias   (beta - mean * scale)
    # o_ref : (Cout, L_pad) f32      lane-dense flat output
    # scratch: [(k*k*Cin_p, L_pad)]  compute-dtype im2col slab (only when k > 1)
    if k == 1:
        cols = x_ref[:, pl.ds(0, l_pad)]                       # aligned slice
    else:
        col_ref = scratch[0]
        for t in range(k * k):
            off = (t // k) * wp + (t % k)                      # static tap offset
            col_ref[t * cin_p:(t + 1) * cin_p, :] = x_ref[:, pl.ds(off, l_pad)]
        cols = col_ref[...]

    y = jnp.dot(w_ref[...], cols, preferred_element_type=jnp.float32)
    y = y + b_ref[...]                                         # f32 epilogue
    if apply_relu:
        y = jnp.maximum(y, 0.0)
    o_ref[...] = y.astype(o_ref.dtype)


# ----------------------------------------------------------------------------
# Wrapper: BasicConv2d forward (stride=1, dilation=1, bias=False)
# ----------------------------------------------------------------------------
def basic_conv2d(params, x, *, relu=False, padding=None,
                 compute_dtype=jnp.bfloat16):
    w, scale, bias = params["w"], params["scale"], params["bias"]
    N, Cin, H, W = x.shape
    Cout, Cin_w, kh, kw = w.shape
    assert Cin == Cin_w and kh == kw, (x.shape, w.shape)
    k = kh
    p = (k // 2) if padding is None else padding

    H_out = H + 2 * p - k + 1
    W_out = W + 2 * p - k + 1
    Wp = W + 2 * p                               # padded row stride
    L_valid = H_out * Wp                         # flat positions we keep
    L_pad = _round_up(L_valid, 128)              # lane-dense, 128-aligned width
    max_off = (k - 1) * Wp + (k - 1)             # largest static tap offset
    rows_total = -(-(L_pad + max_off) // Wp)     # ceil -> rows of padded image
    Lp_total = rows_total * Wp

    # Sublane packing of the compute dtype (f32 -> 8 rows, bf16 -> 16 rows):
    # pad Cin so every im2col scratch write is tile-aligned.
    pack = 8 * 4 // jnp.dtype(compute_dtype).itemsize
    Cin_p = _round_up(Cin, pack)

    # Single pad: channels -> Cin_p, top/left/right by p, bottom to rows_total.
    xp = jnp.pad(x.astype(compute_dtype),
                 ((0, 0), (0, Cin_p - Cin),
                  (p, rows_total - H - p), (p, p)))
    xp_flat = xp.reshape(N, Cin_p, Lp_total)     # contiguous reshape (cheap)

    # Fold BN scale into the conv weight (exact): (x*W)*s + b == x*(W*s) + b.
    # Column layout: index = t*Cin_p + c  with  t = di*k + dj.
    w_f = w * scale[:, None, None, None]
    w_f = jnp.pad(w_f, ((0, 0), (0, Cin_p - Cin), (0, 0), (0, 0)))
    w_f = w_f.transpose(0, 2, 3, 1).reshape(Cout, k * k * Cin_p)
    w_f = w_f.astype(compute_dtype)
    b_f = bias.reshape(Cout, 1).astype(jnp.float32)

    kernel = functools.partial(_conv_bn_relu_kernel, k=k, cin_p=Cin_p, wp=Wp,
                               l_pad=L_pad, apply_relu=relu)

    itemsize = jnp.dtype(compute_dtype).itemsize
    cost = pl.CostEstimate(
        flops=2 * N * Cout * (k * k * Cin_p) * L_pad,
        transcendentals=0,
        bytes_accessed=(xp_flat.size * itemsize + w_f.size * itemsize
                        + b_f.size * 4 + N * Cout * L_pad * 4),
    )

    scratch_shapes = ([pltpu.VMEM((k * k * Cin_p, L_pad), compute_dtype)]
                      if k > 1 else [])

    out_flat = pl.pallas_call(
        kernel,
        out_shape=jax.ShapeDtypeStruct((N, Cout, L_pad), jnp.float32),
        grid=(N,),
        in_specs=[
            pl.BlockSpec((pl.Squeezed(), Cin_p, Lp_total), lambda n: (n, 0, 0)),
            pl.BlockSpec((Cout, k * k * Cin_p), lambda n: (0, 0)),
            pl.BlockSpec((Cout, 1), lambda n: (0, 0)),
        ],
        out_specs=pl.BlockSpec((pl.Squeezed(), Cout, L_pad), lambda n: (n, 0, 0)),
        scratch_shapes=scratch_shapes,
        compiler_params=pltpu.CompilerParams(
            dimension_semantics=("parallel",),
            vmem_limit_bytes=32 * 1024 * 1024),
        cost_estimate=cost,
    )(xp_flat, w_f, b_f)

    # Flat index i*Wp + j -> output pixel (i, j); drop tail + halo columns.
    out = out_flat[:, :, :L_valid].reshape(N, Cout, H_out, Wp)[:, :, :, :W_out]
    return out


# ----------------------------------------------------------------------------
# Deterministic parameter construction (conv weight + eval-mode BN stats)
# ----------------------------------------------------------------------------
def init_basic_conv2d_params(key, cin, cout, k):
    kw_, kg, kb, km, kv = jax.random.split(key, 5)
    fan_in = cin * k * k
    w = jax.random.normal(kw_, (cout, cin, k, k), jnp.float32) / jnp.sqrt(fan_in)
    gamma = 1.0 + 0.1 * jax.random.normal(kg, (cout,), jnp.float32)
    beta = 0.05 * jax.random.normal(kb, (cout,), jnp.float32)
    mean = 0.05 * jax.random.normal(km, (cout,), jnp.float32)
    var = 1.0 + 0.1 * jnp.abs(jax.random.normal(kv, (cout,), jnp.float32))
    eps = 1e-5
    scale = gamma / jnp.sqrt(var + eps)
    bias = beta - mean * scale
    return {"w": w, "scale": scale, "bias": bias}


# ----------------------------------------------------------------------------
# Pure-JAX reference (lax conv, unfolded BN) for correctness checking
# ----------------------------------------------------------------------------
def basic_conv2d_ref(params, x, *, relu=False, padding=None):
    w, scale, bias = params["w"], params["scale"], params["bias"]
    k = w.shape[2]
    p = (k // 2) if padding is None else padding
    y = jax.lax.conv_general_dilated(
        x, w, (1, 1), [(p, p), (p, p)],
        dimension_numbers=("NCHW", "OIHW", "NCHW"))
    y = y * scale.reshape(1, -1, 1, 1) + bias.reshape(1, -1, 1, 1)
    if relu:
        y = jnp.maximum(y, 0.0)
    return y


# ----------------------------------------------------------------------------
if __name__ == "__main__":
    key = jax.random.PRNGKey(0)
    kx, kp1, kp2 = jax.random.split(key, 3)

    N, Cin, H, W = 2, 4, 16, 16
    x = jax.random.normal(kx, (N, Cin, H, W), jnp.float32)

    # BasicConv2d(4, 16, kernel_size=3, padding=1)           (relu=False default)
    params3 = init_basic_conv2d_params(kp1, Cin, 16, 3)
    # BasicConv2d(16, 8, kernel_size=1, relu=True)           (padding=0)
    params1 = init_basic_conv2d_params(kp2, 16, 8, 1)

    @jax.jit
    def fwd(x_in):
        y = basic_conv2d(params3, x_in, relu=False)    # 3x3, pad 1
        y = basic_conv2d(params1, y, relu=True)        # 1x1, pad 0
        return y

    out = jax.block_until_ready(fwd(x))
    assert out.shape == (N, 8, H, W), out.shape

    ref = basic_conv2d_ref(params1,
                           basic_conv2d_ref(params3, x, relu=False),
                           relu=True)
    ref = jax.block_until_ready(ref)

    # bf16 inputs/weights with f32 accumulation -> loosened tolerance.
    if not jnp.allclose(out, ref, atol=5e-2, rtol=5e-2):
        err = float(jnp.max(jnp.abs(out - ref)))
        raise AssertionError(
            f"Pallas result does not match JAX reference (max abs err {err})")

    print("KERNEL_OK")
</pallas_src>

<mosaic_0001>
module attributes {stable_mosaic.version = 11 : i64} {
  func.func @_conv_bn_relu_kernel(%arg0: i32, %arg1: memref<1x16x432xbf16, #tpu.memory_space<vmem>>, %arg2: memref<16x144xbf16, #tpu.memory_space<vmem>>, %arg3: memref<16x1xf32, #tpu.memory_space<vmem>>, %arg4: memref<1x16x384xf32, #tpu.memory_space<vmem>>, %arg5: memref<144x384xbf16, #tpu.memory_space<vmem>>) attributes {dimension_semantics = [#tpu.dimension_semantics<parallel>], iteration_bounds = array<i64: 2>, scalar_prefetch = 0 : i64, scratch_operands = 1 : i64, tpu.core_type = #tpu.core_type<tc>, window_params = [{transform_indices = @transform_0, window_bounds = array<i64: 1, 16, 432>}, {pipeline_mode = #tpu.pipeline_mode<synchronous>, transform_indices = @transform_1, window_bounds = array<i64: 16, 144>}, {pipeline_mode = #tpu.pipeline_mode<synchronous>, transform_indices = @transform_2, window_bounds = array<i64: 16, 1>}, {transform_indices = @transform_3, window_bounds = array<i64: 1, 16, 384>}]} {
    %c0 = arith.constant 0 : index
    %c0_0 = arith.constant 0 : index
    %c0_1 = arith.constant 0 : index
    %0 = vector.load %arg1[%c0, %c0_0, %c0_1] : memref<1x16x432xbf16, #tpu.memory_space<vmem>>, vector<1x16x384xbf16>
    %1 = vector.shape_cast %0 : vector<1x16x384xbf16> to vector<16x384xbf16>
    %c0_2 = arith.constant 0 : index
    %c0_3 = arith.constant 0 : index
    %2 = vector.load %arg5[%c0_2, %c0_3] : memref<144x384xbf16, #tpu.memory_space<vmem>>, vector<16x384xbf16>
    tpu.vector_store %arg5[%c0_2, %c0_3], %1 {strides = array<i32>} : memref<144x384xbf16, #tpu.memory_space<vmem>>, vector<16x384xbf16>,
    %c0_4 = arith.constant 0 : index
    %c0_5 = arith.constant 0 : index
    %c1 = arith.constant 1 : index
    %3 = vector.load %arg1[%c0_4, %c0_5, %c1] : memref<1x16x432xbf16, #tpu.memory_space<vmem>>, vector<1x16x384xbf16>
    %4 = vector.shape_cast %3 : vector<1x16x384xbf16> to vector<16x384xbf16>
    %c16 = arith.constant 16 : index
    %c0_6 = arith.constant 0 : index
    %5 = vector.load %arg5[%c16, %c0_6] : memref<144x384xbf16, #tpu.memory_space<vmem>>, vector<16x384xbf16>
    tpu.vector_store %arg5[%c16, %c0_6], %4 {strides = array<i32>} : memref<144x384xbf16, #tpu.memory_space<vmem>>, vector<16x384xbf16>,
    %c0_7 = arith.constant 0 : index
    %c0_8 = arith.constant 0 : index
    %c2 = arith.constant 2 : index
    %6 = vector.load %arg1[%c0_7, %c0_8, %c2] : memref<1x16x432xbf16, #tpu.memory_space<vmem>>, vector<1x16x384xbf16>
    %7 = vector.shape_cast %6 : vector<1x16x384xbf16> to vector<16x384xbf16>
    %c32 = arith.constant 32 : index
    %c0_9 = arith.constant 0 : index
    %8 = vector.load %arg5[%c32, %c0_9] : memref<144x384xbf16, #tpu.memory_space<vmem>>, vector<16x384xbf16>
    tpu.vector_store %arg5[%c32, %c0_9], %7 {strides = array<i32>} : memref<144x384xbf16, #tpu.memory_space<vmem>>, vector<16x384xbf16>,
    %c0_10 = arith.constant 0 : index
    %c0_11 = arith.constant 0 : index
    %c18 = arith.constant 18 : index
    %9 = vector.load %arg1[%c0_10, %c0_11, %c18] : memref<1x16x432xbf16, #tpu.memory_space<vmem>>, vector<1x16x384xbf16>
    %10 = vector.shape_cast %9 : vector<1x16x384xbf16> to vector<16x384xbf16>
    %c48 = arith.constant 48 : index
    %c0_12 = arith.constant 0 : index
    %11 = vector.load %arg5[%c48, %c0_12] : memref<144x384xbf16, #tpu.memory_space<vmem>>, vector<16x384xbf16>
    tpu.vector_store %arg5[%c48, %c0_12], %10 {strides = array<i32>} : memref<144x384xbf16, #tpu.memory_space<vmem>>, vector<16x384xbf16>,
    %c0_13 = arith.constant 0 : index
    %c0_14 = arith.constant 0 : index
    %c19 = arith.constant 19 : index
    %12 = vector.load %arg1[%c0_13, %c0_14, %c19] : memref<1x16x432xbf16, #tpu.memory_space<vmem>>, vector<1x16x384xbf16>
    %13 = vector.shape_cast %12 : vector<1x16x384xbf16> to vector<16x384xbf16>
    %c64 = arith.constant 64 : index
    %c0_15 = arith.constant 0 : index
    %14 = vector.load %arg5[%c64, %c0_15] : memref<144x384xbf16, #tpu.memory_space<vmem>>, vector<16x384xbf16>
    tpu.vector_store %arg5[%c64, %c0_15], %13 {strides = array<i32>} : memref<144x384xbf16, #tpu.memory_space<vmem>>, vector<16x384xbf16>,
    %c0_16 = arith.constant 0 : index
    %c0_17 = arith.constant 0 : index
    %c20 = arith.constant 20 : index
    %15 = vector.load %arg1[%c0_16, %c0_17, %c20] : memref<1x16x432xbf16, #tpu.memory_space<vmem>>, vector<1x16x384xbf16>
    %16 = vector.shape_cast %15 : vector<1x16x384xbf16> to vector<16x384xbf16>
    %c80 = arith.constant 80 : index
    %c0_18 = arith.constant 0 : index
    %17 = vector.load %arg5[%c80, %c0_18] : memref<144x384xbf16, #tpu.memory_space<vmem>>, vector<16x384xbf16>
    tpu.vector_store %arg5[%c80, %c0_18], %16 {strides = array<i32>} : memref<144x384xbf16, #tpu.memory_space<vmem>>, vector<16x384xbf16>,
    %c0_19 = arith.constant 0 : index
    %c0_20 = arith.constant 0 : index
    %c36 = arith.constant 36 : index
    %18 = vector.load %arg1[%c0_19, %c0_20, %c36] : memref<1x16x432xbf16, #tpu.memory_space<vmem>>, vector<1x16x384xbf16>
    %19 = vector.shape_cast %18 : vector<1x16x384xbf16> to vector<16x384xbf16>
    %c96 = arith.constant 96 : index
    %c0_21 = arith.constant 0 : index
    %20 = vector.load %arg5[%c96, %c0_21] : memref<144x384xbf16, #tpu.memory_space<vmem>>, vector<16x384xbf16>
    tpu.vector_store %arg5[%c96, %c0_21], %19 {strides = array<i32>} : memref<144x384xbf16, #tpu.memory_space<vmem>>, vector<16x384xbf16>,
    %c0_22 = arith.constant 0 : index
    %c0_23 = arith.constant 0 : index
    %c37 = arith.constant 37 : index
    %21 = vector.load %arg1[%c0_22, %c0_23, %c37] : memref<1x16x432xbf16, #tpu.memory_space<vmem>>, vector<1x16x384xbf16>
    %22 = vector.shape_cast %21 : vector<1x16x384xbf16> to vector<16x384xbf16>
    %c112 = arith.constant 112 : index
    %c0_24 = arith.constant 0 : index
    %23 = vector.load %arg5[%c112, %c0_24] : memref<144x384xbf16, #tpu.memory_space<vmem>>, vector<16x384xbf16>
    tpu.vector_store %arg5[%c112, %c0_24], %22 {strides = array<i32>} : memref<144x384xbf16, #tpu.memory_space<vmem>>, vector<16x384xbf16>,
    %c0_25 = arith.constant 0 : index
    %c0_26 = arith.constant 0 : index
    %c38 = arith.constant 38 : index
    %24 = vector.load %arg1[%c0_25, %c0_26, %c38] : memref<1x16x432xbf16, #tpu.memory_space<vmem>>, vector<1x16x384xbf16>
    %25 = vector.shape_cast %24 : vector<1x16x384xbf16> to vector<16x384xbf16>
    %c128 = arith.constant 128 : index
    %c0_27 = arith.constant 0 : index
    %26 = vector.load %arg5[%c128, %c0_27] : memref<144x384xbf16, #tpu.memory_space<vmem>>, vector<16x384xbf16>
    tpu.vector_store %arg5[%c128, %c0_27], %25 {strides = array<i32>} : memref<144x384xbf16, #tpu.memory_space<vmem>>, vector<16x384xbf16>,
    %c0_28 = arith.constant 0 : index
    %c0_29 = arith.constant 0 : index
    %27 = vector.load %arg5[%c0_28, %c0_29] : memref<144x384xbf16, #tpu.memory_space<vmem>>, vector<144x384xbf16>
    %c0_30 = arith.constant 0 : index
    %c0_31 = arith.constant 0 : index
    %28 = vector.load %arg2[%c0_30, %c0_31] : memref<16x144xbf16, #tpu.memory_space<vmem>>, vector<16x144xbf16>
    %cst = arith.constant dense<0.000000e+00> : vector<16x384xf32>
    %29 = tpu.matmul %28, %27, %cst {dimension_numbers = #tpu.dot_dimension_numbers<[1], [0], [0], [1], [0, 0, 1, 1], [], []>} : vector<16x144xbf16>, vector<144x384xbf16>, vector<16x384xf32> -> vector<16x384xf32>
    %c0_32 = arith.constant 0 : index
    %c0_33 = arith.constant 0 : index
    %30 = vector.load %arg3[%c0_32, %c0_33] : memref<16x1xf32, #tpu.memory_space<vmem>>, vector<16x1xf32>
    %31 = vector.broadcast %30 : vector<16x1xf32> to vector<16x384xf32>
    %32 = arith.addf %29, %31 : vector<16x384xf32>
    %c0_34 = arith.constant 0 : index
    %c0_35 = arith.constant 0 : index
    %c0_36 = arith.constant 0 : index
    %33 = vector.load %arg4[%c0_34, %c0_35, %c0_36] : memref<1x16x384xf32, #tpu.memory_space<vmem>>, vector<1x16x384xf32>
    %34 = vector.shape_cast %33 : vector<1x16x384xf32> to vector<16x384xf32>
    %35 = vector.shape_cast %32 : vector<16x384xf32> to vector<1x16x384xf32>
    tpu.vector_store %arg4[%c0_34, %c0_35, %c0_36], %35 {strides = array<i32>} : memref<1x16x384xf32, #tpu.memory_space<vmem>>, vector<1x16x384xf32>,
    return
  }
  func.func @transform_0(%arg0: i32) -> (i32, i32, i32) {
    %c0_i32 = arith.constant 0 : i32
    %c0_i32_0 = arith.constant 0 : i32
    %c0_i32_1 = arith.constant 0 : i32
    return %arg0, %c0_i32, %c0_i32_0 : i32, i32, i32
  }
  func.func @transform_1(%arg0: i32) -> (i32, i32) {
    %c0_i32 = arith.constant 0 : i32
    %c0_i32_0 = arith.constant 0 : i32
    %c0_i32_1 = arith.constant 0 : i32
    return %c0_i32, %c0_i32_0 : i32, i32
  }
  func.func @transform_2(%arg0: i32) -> (i32, i32) {
    %c0_i32 = arith.constant 0 : i32
    %c0_i32_0 = arith.constant 0 : i32
    %c0_i32_1 = arith.constant 0 : i32
    return %c0_i32, %c0_i32_0 : i32, i32
  }
  func.func @transform_3(%arg0: i32) -> (i32, i32, i32) {
    %c0_i32 = arith.constant 0 : i32
    %c0_i32_0 = arith.constant 0 : i32
    %c0_i32_1 = arith.constant 0 : i32
    return %arg0, %c0_i32, %c0_i32_0 : i32, i32, i32
  }
}

module attributes {stable_mosaic.version = 11 : i64} {
  func.func @_conv_bn_relu_kernel(%arg0: i32, %arg1: memref<1x16x256xbf16, #tpu.memory_space<vmem>>, %arg2: memref<8x16xbf16, #tpu.memory_space<vmem>>, %arg3: memref<8x1xf32, #tpu.memory_space<vmem>>, %arg4: memref<1x8x256xf32, #tpu.memory_space<vmem>>) attributes {dimension_semantics = [#tpu.dimension_semantics<parallel>], iteration_bounds = array<i64: 2>, scalar_prefetch = 0 : i64, scratch_operands = 0 : i64, tpu.core_type = #tpu.core_type<tc>, window_params = [{transform_indices = @transform_0, window_bounds = array<i64: 1, 16, 256>}, {pipeline_mode = #tpu.pipeline_mode<synchronous>, transform_indices = @transform_1, window_bounds = array<i64: 8, 16>}, {pipeline_mode = #tpu.pipeline_mode<synchronous>, transform_indices = @transform_2, window_bounds = array<i64: 8, 1>}, {transform_indices = @transform_3, window_bounds = array<i64: 1, 8, 256>}]} {
    %c0 = arith.constant 0 : index
    %c0_0 = arith.constant 0 : index
    %c0_1 = arith.constant 0 : index
    %0 = vector.load %arg1[%c0, %c0_0, %c0_1] : memref<1x16x256xbf16, #tpu.memory_space<vmem>>, vector<1x16x256xbf16>
    %1 = vector.shape_cast %0 : vector<1x16x256xbf16> to vector<16x256xbf16>
    %c0_2 = arith.constant 0 : index
    %c0_3 = arith.constant 0 : index
    %2 = vector.load %arg2[%c0_2, %c0_3] : memref<8x16xbf16, #tpu.memory_space<vmem>>, vector<8x16xbf16>
    %cst = arith.constant dense<0.000000e+00> : vector<8x256xf32>
    %3 = tpu.matmul %2, %1, %cst {dimension_numbers = #tpu.dot_dimension_numbers<[1], [0], [0], [1], [0, 0, 1, 1], [], []>} : vector<8x16xbf16>, vector<16x256xbf16>, vector<8x256xf32> -> vector<8x256xf32>
    %c0_4 = arith.constant 0 : index
    %c0_5 = arith.constant 0 : index
    %4 = vector.load %arg3[%c0_4, %c0_5] : memref<8x1xf32, #tpu.memory_space<vmem>>, vector<8x1xf32>
    %5 = vector.broadcast %4 : vector<8x1xf32> to vector<8x256xf32>
    %6 = arith.addf %3, %5 : vector<8x256xf32>
    %cst_6 = arith.constant 0.000000e+00 : f32
    %7 = vector.broadcast %cst_6 : f32 to vector<8x256xf32>
    %8 = arith.maximumf %6, %7 : vector<8x256xf32>
    %c0_7 = arith.constant 0 : index
    %c0_8 = arith.constant 0 : index
    %c0_9 = arith.constant 0 : index
    %9 = vector.load %arg4[%c0_7, %c0_8, %c0_9] : memref<1x8x256xf32, #tpu.memory_space<vmem>>, vector<1x8x256xf32>
    %10 = vector.shape_cast %9 : vector<1x8x256xf32> to vector<8x256xf32>
    %11 = vector.shape_cast %8 : vector<8x256xf32> to vector<1x8x256xf32>
    tpu.vector_store %arg4[%c0_7, %c0_8, %c0_9], %11 {strides = array<i32>} : memref<1x8x256xf32, #tpu.memory_space<vmem>>, vector<1x8x256xf32>,
    return
  }
  func.func @transform_0(%arg0: i32) -> (i32, i32, i32) {
    %c0_i32 = arith.constant 0 : i32
    %c0_i32_0 = arith.constant 0 : i32
    %c0_i32_1 = arith.constant 0 : i32
    return %arg0, %c0_i32, %c0_i32_0 : i32, i32, i32
  }
  func.func @transform_1(%arg0: i32) -> (i32, i32) {
    %c0_i32 = arith.constant 0 : i32
    %c0_i32_0 = arith.constant 0 : i32
    %c0_i32_1 = arith.constant 0 : i32
    return %c0_i32, %c0_i32_0 : i32, i32
  }
  func.func @transform_2(%arg0: i32) -> (i32, i32) {
    %c0_i32 = arith.constant 0 : i32
    %c0_i32_0 = arith.constant 0 : i32
    %c0_i32_1 = arith.constant 0 : i32
    return %c0_i32, %c0_i32_0 : i32, i32
  }
  func.func @transform_3(%arg0: i32) -> (i32, i32, i32) {
    %c0_i32 = arith.constant 0 : i32
    %c0_i32_0 = arith.constant 0 : i32
    %c0_i32_1 = arith.constant 0 : i32
    return %arg0, %c0_i32, %c0_i32_0 : i32, i32, i32
  }
}

</mosaic_0001>

<llo_original>
// kernel: fwd.3
$region0: #{fwd.3}
  #allocation0 [shape = 'u32[]', space=smem, size = 0x4, offset = 0x4, fixed_abs, tag = 'smem constant byte address 0x4 - core index']
  #allocation1 [shape = 'u32[144,128]{1,0:T(1,128)}', space=vmem, size = 0x12000, scoped, tag = 'internal scratch']
  %s0 = inlined_call_operand.vmem [shape: bf16[2,16,256], index: 0, kind: input, shape index: {}]
  %s1 = inlined_call_operand.vmem [shape: bf16[8,16], index: 1, kind: input, shape index: {}]
  %s2 = inlined_call_operand.vmem [shape: f32[8,1], index: 2, kind: input, shape index: {}]
  %s3 = inlined_call_operand.vmem [shape: f32[2,8,256], index: 3, kind: output, shape index: {}]
  %s4 = sld [smem:[#allocation0]]
  $region45: #{fwd.3} parent=0
    _
  %s6 = ssub.s32 1, %s4
  %s7 = scalar_select 0, %s6, %s4
  loop: start=0, step=1, limit=4
  $region2: #{fwd.3} parent=0 // loop_pre_header
    _
  $region3: #{fwd.3} parent=0 // loop_header
    %s9 = sphi 0, %s13
    %p10 = scmp.ge.s32.totalorder %s9, 4
    %s19 = sphi 0, %s21
    %s22 = sphi 0, %s19
    %s23 = sphi 0, %s22
    %s39 = sphi 0, %s23
    %s43 = sphi 0, %s43
    %s45 = sphi 0, %s43
    %s46 = sphi 0, %s45
    %s60 = sphi 0, %s46
    %s64 = sphi 0, %s64
    %s66 = sphi 0, %s64
    %s67 = sphi 0, %s66
    %s81 = sphi 0, %s67
    %s87 = sphi 0, %s89
    %s90 = sphi 0, %s87
    %s91 = sphi 0, %s90
    %s107 = sphi 0, %s91
  $region4: #{fwd.3} parent=0 // loop_header_branch
    %12 = sbr.rel (%p10) target = $region8
  $region5: #{fwd.3} parent=0 // loop_body
    %s14 = ssub.s32 %s9, 1
    %s15 = ssub.s32 %s9, 2
    %s16 = sadd.s32 %s9, 1
    %s17 = ssub.s32 %s9, %s16
    %p18 = scmp.eq.s32.totalorder %s17, 0
    %s20 = sadd.s32 %s19, 1
    %s21 = scalar_select %p18, %s19, %s20
    %p24 = pneg %p18
    %p25 = scmp.eq.s32.totalorder %s9, 1
    %p26 = por %p24, %p25
    %p27 = scmp.ne.s32.totalorder %s19, %s22
    %p28 = scmp.eq.s32.totalorder %s9, 0
    %p29 = por %p27, %p28
    %p30 = scmp.ne.s32.totalorder %s19, %s22
    %p31 = scmp.eq.s32.totalorder %s14, 1
    %p32 = por %p30, %p31
    %p33 = scmp.ne.s32.totalorder %s22, %s23
    %p34 = scmp.eq.s32.totalorder %s14, 0
    %p35 = por %p33, %p34
    %p36 = scmp.ne.s32.totalorder %s22, %s23
    %p37 = scmp.eq.s32.totalorder %s15, 1
    %p38 = por %p36, %p37
    %p40 = scmp.ne.s32.totalorder %s23, %s39
    %p41 = scmp.eq.s32.totalorder %s15, 0
    %p42 = por %p40, %p41
    %s44 = sadd.s32 %s43, 1
    %p47 = scmp.eq.s32.totalorder %s9, 1
    %p48 = scmp.ne.s32.totalorder %s43, %s45
    %p49 = scmp.eq.s32.totalorder %s9, 0
    %p50 = por %p48, %p49
    %p51 = scmp.ne.s32.totalorder %s43, %s45
    %p52 = scmp.eq.s32.totalorder %s14, 1
    %p53 = por %p51, %p52
    %p54 = scmp.ne.s32.totalorder %s45, %s46
    %p55 = scmp.eq.s32.totalorder %s14, 0
    %p56 = por %p54, %p55
    %p57 = scmp.ne.s32.totalorder %s45, %s46
    %p58 = scmp.eq.s32.totalorder %s15, 1
    %p59 = por %p57, %p58
    %p61 = scmp.ne.s32.totalorder %s46, %s60
    %p62 = scmp.eq.s32.totalorder %s15, 0
    %p63 = por %p61, %p62
    %s65 = sadd.s32 %s64, 1
    %p68 = scmp.eq.s32.totalorder %s9, 1
    %p69 = scmp.ne.s32.totalorder %s64, %s66
    %p70 = scmp.eq.s32.totalorder %s9, 0
    %p71 = por %p69, %p70
    %p72 = scmp.ne.s32.totalorder %s64, %s66
    %p73 = scmp.eq.s32.totalorder %s14, 1
    %p74 = por %p72, %p73
    %p75 = scmp.ne.s32.totalorder %s66, %s67
    %p76 = scmp.eq.s32.totalorder %s14, 0
    %p77 = por %p75, %p76
    %p78 = scmp.ne.s32.totalorder %s66, %s67
    %p79 = scmp.eq.s32.totalorder %s15, 1
    %p80 = por %p78, %p79
    %p82 = scmp.ne.s32.totalorder %s67, %s81
    %p83 = scmp.eq.s32.totalorder %s15, 0
    %p84 = por %p82, %p83
    %s85 = ssub.s32 %s9, %s16
    %p86 = scmp.eq.s32.totalorder %s85, 0
    %s88 = sadd.s32 %s87, 1
    %s89 = scalar_select %p86, %s87, %s88
    %p92 = pneg %p86
    %p93 = scmp.eq.s32.totalorder %s9, 1
    %p94 = por %p92, %p93
    %p95 = scmp.ne.s32.totalorder %s87, %s90
    %p96 = scmp.eq.s32.totalorder %s9, 0
    %p97 = por %p95, %p96
    %p98 = scmp.ne.s32.totalorder %s87, %s90
    %p99 = scmp.eq.s32.totalorder %s14, 1
    %p100 = por %p98, %p99
    %p101 = scmp.ne.s32.totalorder %s90, %s91
    %p102 = scmp.eq.s32.totalorder %s14, 0
    %p103 = por %p101, %p102
    %p104 = scmp.ne.s32.totalorder %s90, %s91
    %p105 = scmp.eq.s32.totalorder %s15, 1
    %p106 = por %p104, %p105
    %p108 = scmp.ne.s32.totalorder %s91, %s107
    %p109 = scmp.eq.s32.totalorder %s15, 0
    %p110 = por %p108, %p109
    %p111 = scmp.le.s32.totalorder 1, %s9
    %p112 = scmp.lt.s32.totalorder %s9, 3
    %p113 = pnand %p111, %p112
    %p114 = pneg %p113
    // Predicated region
    $region9: #{fwd.3} parent=5 // pred_check
      _
    $region10: #{fwd.3} parent=5 // pred_check_branch
      %116 = sbr.rel (%p113) target = $region12
    $region11: #{fwd.3} parent=5 // pred_region
      %s117 = ssub.s32 %s9, 1
      // Predicated region
      $region13: #{fwd.3} parent=11 // pred_check
        %p118 = pneg %p56
      $region14: #{fwd.3} parent=11 // pred_check_branch
        %120 = sbr.rel (%p118) target = $region16
      $region15: #{fwd.3} parent=11 // pred_region
        _
      $region16: #{fwd.3} parent=11 // pred_fallthru
        _
      // Predicated region
      $region17: #{fwd.3} parent=11 // pred_check
        %p121 = pneg %p77
      $region18: #{fwd.3} parent=11 // pred_check_branch
        %123 = sbr.rel (%p121) target = $region20
      $region19: #{fwd.3} parent=11 // pred_region
        _
      $region20: #{fwd.3} parent=11 // pred_fallthru
        _
    $region12: #{fwd.3} parent=5 // pred_fallthru
      _
    %p124 = scmp.lt.s32.totalorder %s9, 2
    // Predicated region
    $region21: #{fwd.3} parent=5 // pred_check
      %p125 = pneg %p124
    $region22: #{fwd.3} parent=5 // pred_check_branch
      %127 = sbr.rel (%p125) target = $region24
    $region23: #{fwd.3} parent=5 // pred_region
      // Predicated region
      $region25: #{fwd.3} parent=23 // pred_check
        %p128 = pneg %p29
      $region26: #{fwd.3} parent=23 // pred_check_branch
        %130 = sbr.rel (%p128) target = $region28
      $region27: #{fwd.3} parent=23 // pred_region
        %p131 = scmp.lt.s32.totalorder %s9, 1
        %s132 = scalar_select %p131, %s9, 1
        %s133 = smul.addr %s132, 4
        %s134 = smul.addr %s133, 4
        %s135 = scalar_lea.vmem %s0, %s134
      $region28: #{fwd.3} parent=23 // pred_fallthru
        _
    $region24: #{fwd.3} parent=5 // pred_fallthru
      _
    %p136 = scmp.le.s32.totalorder 1, %s9
    %p137 = scmp.lt.s32.totalorder %s9, 3
    %p138 = pnand %p136, %p137
    %p139 = pneg %p138
    // Predicated region
    $region29: #{fwd.3} parent=5 // pred_check
      _
    $region30: #{fwd.3} parent=5 // pred_check_branch
      %141 = sbr.rel (%p138) target = $region32
    $region31: #{fwd.3} parent=5 // pred_region
      %s142 = ssub.s32 %s9, 1
      %p143 = scmp.lt.s32.totalorder %s14, 1
      %s144 = scalar_select %p143, %s14, 1
      %s145 = smul.addr %s144, 4
      %s146 = smul.addr %s145, 4
      %s147 = scalar_lea.vmem %s0, %s146
      %p148 = pneg %p35
      %p149 = pneg %p32
      %p150 = pneg %p56
      %p151 = pneg %p53
      %p152 = pneg %p77
      %p153 = pneg %p74
      %p154 = pneg %p103
      %p155 = pneg %p100
      %p156 = scmp.lt.s32.totalorder %s14, 1
      %s157 = scalar_select %p156, %s14, 1
      %s158 = smul.addr %s157, 2
      %s159 = smul.addr %s158, 8
      %s160 = scalar_lea.vmem %s3, %s159
      %p161 = scmp.lt.s32.totalorder %s14, 1
      %s162 = scalar_select %p161, %s14, 1
      %s163 = smul.addr %s162, 4
      %s164 = smul.addr %s163, 4
      %s165 = scalar_lea.vmem %s0, %s164
      %p166 = scmp.lt.s32.totalorder %s14, 1
      %s167 = scalar_select %p166, %s14, 1
      %s168 = smul.addr %s167, 2
      %s169 = smul.addr %s168, 8
      %s170 = scalar_lea.vmem %s3, %s169
      %v172 = vld [vmem:[%s165] sm:$0xff]
      %v173 = vld [vmem:[%s165 + $0x8] sm:$0xff]
      %v174 = vld [vmem:[%s1] sm:$0xf]
      %v175 = vld [vmem:[%s2] sm:$0xff]
      %177 = vset.pattern.permute.xlu0 0
      %178 = vperm.xlu0 %177, %v175
      %v179 = vpop.permute.xlu0 %178
      %v183 = vunpack.c.l.b16 %v172
      %v184 = vunpack.c.h.b16 %v172
      %v185 = vunpack.c.l.b16 %v173
      %v186 = vunpack.c.h.b16 %v173
      %v187 = vpack.c.b16 %v185, %v183
      %v188 = vpack.c.b16 %v186, %v184
      %vm191 = vcmask 130048
      %v193 = vsel %vm191, %v174, 0
      %195 = vmatprep.subr.bf16.mxu0 %v188
      %196 = vmatpush1.bf16.msra.mxu0 %v187
      %197 = vmatprep.subr.bf16.mxu0 0
      %198 = vmatpush1.bf16.msra.mxu0 0
      %199 = vmatprep.subr.bf16.mxu0 0
      %200 = vmatpush1.bf16.msra.mxu0 0
      %201 = vmatprep.subr.bf16.mxu0 0
      %202 = vmatpush1.bf16.msra.mxu0 0
      %203 = vmatprep.subr.bf16.mxu0 0
      %204 = vmatpush1.bf16.msra.mxu0 0
      %205 = vmatprep.subr.bf16.mxu0 0
      %206 = vmatpush1.bf16.msra.mxu0 0
      %207 = vmatprep.subr.bf16.mxu0 0
      %208 = vmatpush1.bf16.msra.mxu0 0
      %209 = vmatprep.subr.bf16.mxu0 0
      %210 = vmatpush1.bf16.msra.mxu0 0
      %211 = vmatprep.subr.bf16.mxu0 0
      %212 = vmatpush1.bf16.msra.mxu0 0
      %213 = vmatprep.subr.bf16.mxu0 0
      %214 = vmatpush1.bf16.msra.mxu0 0
      %215 = vmatprep.subr.bf16.mxu0 0
      %216 = vmatpush1.bf16.msra.mxu0 0
      %217 = vmatprep.subr.bf16.mxu0 0
      %218 = vmatpush1.bf16.msra.mxu0 0
      %219 = vmatprep.subr.bf16.mxu0 0
      %220 = vmatpush1.bf16.msra.mxu0 0
      %221 = vmatprep.subr.bf16.mxu0 0
      %222 = vmatpush1.bf16.msra.mxu0 0
      %223 = vmatprep.subr.bf16.mxu0 0
      %224 = vmatpush1.bf16.msra.mxu0 0
      %225 = vmatprep.subr.bf16.mxu0 0
      %226 = vmatpush1.bf16.msra.mxu0 0
      %227 = vmatprep.mubr.bf16.mxu0 0
      %228 = vmatmul.mubr.bf16.gmra.mrb[0].mxu0 %v193
      %v229 = vpop.f32.mrb[0].mxu0
      %v230 = vadd.f32 %v179, %v229
      %v231 = vpop.f32.mrb[0].mxu0
      %v232 = vadd.f32 %v179, %v231
      %v233 = vpop.f32.mrb[0].mxu0
      %v234 = vpop.f32.mrb[0].mxu0
      %235 = vdwg.mxu0
      %v236 = vmax.f32 %v230, 0.0
      %v237 = vmax.f32 %v232, 0.0
      %238 = vst [vmem:[%s170] sm:$0xff] %v236
      %239 = vst [vmem:[%s170 + $0x8] sm:$0xff] %v237
      %p240 = scmp.lt.s32.totalorder %s14, 1
      %s241 = scalar_select %p240, %s14, 1
      %s242 = smul.addr %s241, 2
      %s243 = smul.addr %s242, 8
      %s244 = scalar_lea.vmem %s3, %s243
      // Predicated region
      $region33: #{fwd.3} parent=31 // pred_check
        %p245 = pneg %p100
      $region34: #{fwd.3} parent=31 // pred_check_branch
        %247 = sbr.rel (%p245) target = $region36
      $region35: #{fwd.3} parent=31 // pred_region
        _
      $region36: #{fwd.3} parent=31 // pred_fallthru
        _
    $region32: #{fwd.3} parent=5 // pred_fallthru
      _
    %p248 = scmp.le.s32.totalorder 2, %s9
    // Predicated region
    $region37: #{fwd.3} parent=5 // pred_check
      %p249 = pneg %p248
    $region38: #{fwd.3} parent=5 // pred_check_branch
      %251 = sbr.rel (%p249) target = $region40
    $region39: #{fwd.3} parent=5 // pred_region
      %s252 = ssub.s32 %s9, 2
      // Predicated region
      $region41: #{fwd.3} parent=39 // pred_check
        %p253 = pneg %p106
      $region42: #{fwd.3} parent=39 // pred_check_branch
        %255 = sbr.rel (%p253) target = $region44
      $region43: #{fwd.3} parent=39 // pred_region
        %p256 = scmp.lt.s32.totalorder %s15, 1
        %s257 = scalar_select %p256, %s15, 1
        %s258 = smul.addr %s257, 2
        %s259 = smul.addr %s258, 8
        %s260 = scalar_lea.vmem %s3, %s259
      $region44: #{fwd.3} parent=39 // pred_fallthru
        _
    $region40: #{fwd.3} parent=5 // pred_fallthru
      _
  $region6: #{fwd.3} parent=0 // loop_footer
    %s13 = sadd.s32 1, %s9
  $region7: #{fwd.3} parent=0 // loop_footer_branch
    %8 = sbr.rel target = $region3
  $region8: #{fwd.3} parent=0 // loop_exit
    _

// kernel: fwd.2
$region0: #{fwd.2}
  #allocation0 [shape = 'u32[]', space=smem, size = 0x4, offset = 0x4, fixed_abs, tag = 'smem constant byte address 0x4 - core index']
  #allocation1 [shape = 'u32[144,128]{1,0:T(1,128)}', space=vmem, size = 0x12000, scoped, tag = 'internal scratch']
  #allocation2 [shape = 'bf16[144,384]{1,0:T(16,128)(2,1)}', space=vmem, size = 0x1b000, scoped, tag = 'scratch operand']
  %s0 = inlined_call_operand.vmem [shape: bf16[2,16,432], index: 0, kind: input, shape index: {}]
  %s1 = inlined_call_operand.vmem [shape: bf16[16,144], index: 1, kind: input, shape index: {}]
  %s2 = inlined_call_operand.vmem [shape: f32[16,1], index: 2, kind: input, shape index: {}]
  %s3 = inlined_call_operand.vmem [shape: f32[2,16,384], index: 3, kind: output, shape index: {}]
  %s4 = sld [smem:[#allocation0]]
  $region45: #{fwd.2} parent=0
    _
  %s6 = ssub.s32 1, %s4
  %s7 = scalar_select 0, %s6, %s4
  loop: start=0, step=1, limit=4
  $region2: #{fwd.2} parent=0 // loop_pre_header
    _
  $region3: #{fwd.2} parent=0 // loop_header
    %s9 = sphi 0, %s13
    %p10 = scmp.ge.s32.totalorder %s9, 4
    %s19 = sphi 0, %s21
    %s22 = sphi 0, %s19
    %s23 = sphi 0, %s22
    %s39 = sphi 0, %s23
    %s43 = sphi 0, %s43
    %s45 = sphi 0, %s43
    %s46 = sphi 0, %s45
    %s60 = sphi 0, %s46
    %s64 = sphi 0, %s64
    %s66 = sphi 0, %s64
    %s67 = sphi 0, %s66
    %s81 = sphi 0, %s67
    %s87 = sphi 0, %s89
    %s90 = sphi 0, %s87
    %s91 = sphi 0, %s90
    %s107 = sphi 0, %s91
  $region4: #{fwd.2} parent=0 // loop_header_branch
    %12 = sbr.rel (%p10) target = $region8
  $region5: #{fwd.2} parent=0 // loop_body
    %s14 = ssub.s32 %s9, 1
    %s15 = ssub.s32 %s9, 2
    %s16 = sadd.s32 %s9, 1
    %s17 = ssub.s32 %s9, %s16
    %p18 = scmp.eq.s32.totalorder %s17, 0
    %s20 = sadd.s32 %s19, 1
    %s21 = scalar_select %p18, %s19, %s20
    %p24 = pneg %p18
    %p25 = scmp.eq.s32.totalorder %s9, 1
    %p26 = por %p24, %p25
    %p27 = scmp.ne.s32.totalorder %s19, %s22
    %p28 = scmp.eq.s32.totalorder %s9, 0
    %p29 = por %p27, %p28
    %p30 = scmp.ne.s32.totalorder %s19, %s22
    %p31 = scmp.eq.s32.totalorder %s14, 1
    %p32 = por %p30, %p31
    %p33 = scmp.ne.s32.totalorder %s22, %s23
    %p34 = scmp.eq.s32.totalorder %s14, 0
    %p35 = por %p33, %p34
    %p36 = scmp.ne.s32.totalorder %s22, %s23
    %p37 = scmp.eq.s32.totalorder %s15, 1
    %p38 = por %p36, %p37
    %p40 = scmp.ne.s32.totalorder %s23, %s39
    %p41 = scmp.eq.s32.totalorder %s15, 0
    %p42 = por %p40, %p41
    %s44 = sadd.s32 %s43, 1
    %p47 = scmp.eq.s32.totalorder %s9, 1
    %p48 = scmp.ne.s32.totalorder %s43, %s45
    %p49 = scmp.eq.s32.totalorder %s9, 0
    %p50 = por %p48, %p49
    %p51 = scmp.ne.s32.totalorder %s43, %s45
    %p52 = scmp.eq.s32.totalorder %s14, 1
    %p53 = por %p51, %p52
    %p54 = scmp.ne.s32.totalorder %s45, %s46
    %p55 = scmp.eq.s32.totalorder %s14, 0
    %p56 = por %p54, %p55
    %p57 = scmp.ne.s32.totalorder %s45, %s46
    %p58 = scmp.eq.s32.totalorder %s15, 1
    %p59 = por %p57, %p58
    %p61 = scmp.ne.s32.totalorder %s46, %s60
    %p62 = scmp.eq.s32.totalorder %s15, 0
    %p63 = por %p61, %p62
    %s65 = sadd.s32 %s64, 1
    %p68 = scmp.eq.s32.totalorder %s9, 1
    %p69 = scmp.ne.s32.totalorder %s64, %s66
    %p70 = scmp.eq.s32.totalorder %s9, 0
    %p71 = por %p69, %p70
    %p72 = scmp.ne.s32.totalorder %s64, %s66
    %p73 = scmp.eq.s32.totalorder %s14, 1
    %p74 = por %p72, %p73
    %p75 = scmp.ne.s32.totalorder %s66, %s67
    %p76 = scmp.eq.s32.totalorder %s14, 0
    %p77 = por %p75, %p76
    %p78 = scmp.ne.s32.totalorder %s66, %s67
    %p79 = scmp.eq.s32.totalorder %s15, 1
    %p80 = por %p78, %p79
    %p82 = scmp.ne.s32.totalorder %s67, %s81
    %p83 = scmp.eq.s32.totalorder %s15, 0
    %p84 = por %p82, %p83
    %s85 = ssub.s32 %s9, %s16
    %p86 = scmp.eq.s32.totalorder %s85, 0
    %s88 = sadd.s32 %s87, 1
    %s89 = scalar_select %p86, %s87, %s88
    %p92 = pneg %p86
    %p93 = scmp.eq.s32.totalorder %s9, 1
    %p94 = por %p92, %p93
    %p95 = scmp.ne.s32.totalorder %s87, %s90
    %p96 = scmp.eq.s32.totalorder %s9, 0
    %p97 = por %p95, %p96
    %p98 = scmp.ne.s32.totalorder %s87, %s90
    %p99 = scmp.eq.s32.totalorder %s14, 1
    %p100 = por %p98, %p99
    %p101 = scmp.ne.s32.totalorder %s90, %s91
    %p102 = scmp.eq.s32.totalorder %s14, 0
    %p103 = por %p101, %p102
    %p104 = scmp.ne.s32.totalorder %s90, %s91
    %p105 = scmp.eq.s32.totalorder %s15, 1
    %p106 = por %p104, %p105
    %p108 = scmp.ne.s32.totalorder %s91, %s107
    %p109 = scmp.eq.s32.totalorder %s15, 0
    %p110 = por %p108, %p109
    %p111 = scmp.le.s32.totalorder 1, %s9
    %p112 = scmp.lt.s32.totalorder %s9, 3
    %p113 = pnand %p111, %p112
    %p114 = pneg %p113
    // Predicated region
    $region9: #{fwd.2} parent=5 // pred_check
      _
    $region10: #{fwd.2} parent=5 // pred_check_branch
      %116 = sbr.rel (%p113) target = $region12
    $region11: #{fwd.2} parent=5 // pred_region
      %s117 = ssub.s32 %s9, 1
      // Predicated region
      $region13: #{fwd.2} parent=11 // pred_check
        %p118 = pneg %p56
      $region14: #{fwd.2} parent=11 // pred_check_branch
        %120 = sbr.rel (%p118) target = $region16
      $region15: #{fwd.2} parent=11 // pred_region
        _
      $region16: #{fwd.2} parent=11 // pred_fallthru
        _
      // Predicated region
      $region17: #{fwd.2} parent=11 // pred_check
        %p121 = pneg %p77
      $region18: #{fwd.2} parent=11 // pred_check_branch
        %123 = sbr.rel (%p121) target = $region20
      $region19: #{fwd.2} parent=11 // pred_region
        _
      $region20: #{fwd.2} parent=11 // pred_fallthru
        _
    $region12: #{fwd.2} parent=5 // pred_fallthru
      _
    %p124 = scmp.lt.s32.totalorder %s9, 2
    // Predicated region
    $region21: #{fwd.2} parent=5 // pred_check
      %p125 = pneg %p124
    $region22: #{fwd.2} parent=5 // pred_check_branch
      %127 = sbr.rel (%p125) target = $region24
    $region23: #{fwd.2} parent=5 // pred_region
      // Predicated region
      $region25: #{fwd.2} parent=23 // pred_check
        %p128 = pneg %p29
      $region26: #{fwd.2} parent=23 // pred_check_branch
        %130 = sbr.rel (%p128) target = $region28
      $region27: #{fwd.2} parent=23 // pred_region
        %p131 = scmp.lt.s32.totalorder %s9, 1
        %s132 = scalar_select %p131, %s9, 1
        %s133 = smul.addr %s132, 8
        %s134 = smul.addr %s133, 4
        %s135 = scalar_lea.vmem %s0, %s134
      $region28: #{fwd.2} parent=23 // pred_fallthru
        _
    $region24: #{fwd.2} parent=5 // pred_fallthru
      _
    %p136 = scmp.le.s32.totalorder 1, %s9
    %p137 = scmp.lt.s32.totalorder %s9, 3
    %p138 = pnand %p136, %p137
    %p139 = pneg %p138
    // Predicated region
    $region29: #{fwd.2} parent=5 // pred_check
      _
    $region30: #{fwd.2} parent=5 // pred_check_branch
      %141 = sbr.rel (%p138) target = $region32
    $region31: #{fwd.2} parent=5 // pred_region
      %s142 = ssub.s32 %s9, 1
      %p143 = scmp.lt.s32.totalorder %s14, 1
      %s144 = scalar_select %p143, %s14, 1
      %s145 = smul.addr %s144, 8
      %s146 = smul.addr %s145, 4
      %s147 = scalar_lea.vmem %s0, %s146
      %p148 = pneg %p35
      %p149 = pneg %p32
      %p150 = pneg %p56
      %p151 = pneg %p53
      %p152 = pneg %p77
      %p153 = pneg %p74
      %p154 = pneg %p103
      %p155 = pneg %p100
      %p156 = scmp.lt.s32.totalorder %s14, 1
      %s157 = scalar_select %p156, %s14, 1
      %s158 = smul.addr %s157, 6
      %s159 = smul.addr %s158, 8
      %s160 = scalar_lea.vmem %s3, %s159
      %p161 = scmp.lt.s32.totalorder %s14, 1
      %s162 = scalar_select %p161, %s14, 1
      %s163 = smul.addr %s162, 8
      %s164 = smul.addr %s163, 4
      %s165 = scalar_lea.vmem %s0, %s164
      %p166 = scmp.lt.s32.totalorder %s14, 1
      %s167 = scalar_select %p166, %s14, 1
      %s168 = smul.addr %s167, 6
      %s169 = smul.addr %s168, 8
      %s170 = scalar_lea.vmem %s3, %s169
      %v172 = vld [vmem:[%s165] sm:$0xff]
      %v173 = vld [vmem:[%s165 + $0x8] sm:$0xf]
      %v174 = vld [vmem:[%s165 + $0x10] sm:$0xff]
      %v175 = vld [vmem:[%s165 + $0x18] sm:$0xf]
      %v180 = vunpack.c.l.b16 %v172
      %v181 = vunpack.c.h.b16 %v172
      %v182 = vunpack.c.l.b16 %v173
      %v183 = vunpack.c.l.b16 %v174
      %v184 = vunpack.c.h.b16 %v174
      %v185 = vunpack.c.l.b16 %v175
      %v186 = vpack.c.b16 %v183, %v180
      %v187 = vpack.c.b16 %v184, %v181
      %v188 = vpack.c.b16 %v185, %v182
      %192 = vst [vmem:[#allocation2] sm:$0xff] %v186
      %193 = vst [vmem:[#allocation2 + $0x8] sm:$0xff] %v187
      %194 = vst [vmem:[#allocation2 + $0x10] sm:$0xff] %v188
      %v195 = vld [vmem:[%s165] sm:$0xff]
      %v196 = vld [vmem:[%s165 + $0x8] sm:$0xff]
      %v197 = vld [vmem:[%s165 + $0x10] sm:$0xff]
      %v198 = vld [vmem:[%s165 + $0x18] sm:$0xff]
      %v203 = vunpack.c.l.b16 %v195
      %v204 = vunpack.c.h.b16 %v195
      %v205 = vunpack.c.l.b16 %v196
      %v206 = vunpack.c.h.b16 %v196
      %v207 = vunpack.c.l.b16 %v197
      %v208 = vunpack.c.h.b16 %v197
      %v209 = vunpack.c.l.b16 %v198
      %v210 = vunpack.c.h.b16 %v198
      %v211 = vpack.c.b16 %v207, %v203
      %v212 = vpack.c.b16 %v208, %v204
      %v213 = vpack.c.b16 %v209, %v205
      %v214 = vpack.c.b16 %v210, %v206
      %215 = vrot.lane.b32.xlu0 %v211, 127
      %v216 = vpop.permute.xlu0 %215
      %217 = vrot.lane.b32.xlu0 %v212, 127
      %v218 = vpop.permute.xlu0 %217
      %219 = vrot.lane.b32.xlu0 %v213, 127
      %v220 = vpop.permute.xlu0 %219
      %221 = vrot.lane.b32.xlu0 %v214, 127
      %v222 = vpop.permute.xlu0 %221
      %vm223 = vcmask 1039360
      %v224 = vsel %vm223, %v216, %v218
      %v225 = vsel %vm223, %v218, %v220
      %v226 = vsel %vm223, %v220, %v222
      %230 = vst [vmem:[#allocation2 + $0x18] sm:$0xff] %v224
      %231 = vst [vmem:[#allocation2 + $0x20] sm:$0xff] %v225
      %232 = vst [vmem:[#allocation2 + $0x28] sm:$0xff] %v226
      %v233 = vld [vmem:[%s165] sm:$0xff]
      %v234 = vld [vmem:[%s165 + $0x8] sm:$0xff]
      %v235 = vld [vmem:[%s165 + $0x10] sm:$0xff]
      %v236 = vld [vmem:[%s165 + $0x18] sm:$0xff]
      %v241 = vunpack.c.l.b16 %v233
      %v242 = vunpack.c.h.b16 %v233
      %v243 = vunpack.c.l.b16 %v234
      %v244 = vunpack.c.h.b16 %v234
      %v245 = vunpack.c.l.b16 %v235
      %v246 = vunpack.c.h.b16 %v235
      %v247 = vunpack.c.l.b16 %v236
      %v248 = vunpack.c.h.b16 %v236
      %v249 = vpack.c.b16 %v245, %v241
      %v250 = vpack.c.b16 %v246, %v242
      %v251 = vpack.c.b16 %v247, %v243
      %v252 = vpack.c.b16 %v248, %v244
      %253 = vrot.lane.b32.xlu0 %v249, 126
      %v254 = vpop.permute.xlu0 %253
      %255 = vrot.lane.b32.xlu0 %v250, 126
      %v256 = vpop.permute.xlu0 %255
      %257 = vrot.lane.b32.xlu0 %v251, 126
      %v258 = vpop.permute.xlu0 %257
      %259 = vrot.lane.b32.xlu0 %v252, 126
      %v260 = vpop.permute.xlu0 %259
      %vm261 = vcmask 1031168
      %v262 = vsel %vm261, %v254, %v256
      %v263 = vsel %vm261, %v256, %v258
      %v264 = vsel %vm261, %v258, %v260
      %268 = vst [vmem:[#allocation2 + $0x30] sm:$0xff] %v262
      %269 = vst [vmem:[#allocation2 + $0x38] sm:$0xff] %v263
      %270 = vst [vmem:[#allocation2 + $0x40] sm:$0xff] %v264
      %v271 = vld [vmem:[%s165] sm:$0xff]
      %v272 = vld [vmem:[%s165 + $0x8] sm:$0xff]
      %v273 = vld [vmem:[%s165 + $0x10] sm:$0xff]
      %v274 = vld [vmem:[%s165 + $0x18] sm:$0xff]
      %v279 = vunpack.c.l.b16 %v271
      %v280 = vunpack.c.h.b16 %v271
      %v281 = vunpack.c.l.b16 %v272
      %v282 = vunpack.c.h.b16 %v272
      %v283 = vunpack.c.l.b16 %v273
      %v284 = vunpack.c.h.b16 %v273
      %v285 = vunpack.c.l.b16 %v274
      %v286 = vunpack.c.h.b16 %v274
      %v287 = vpack.c.b16 %v283, %v279
      %v288 = vpack.c.b16 %v284, %v280
      %v289 = vpack.c.b16 %v285, %v281
      %v290 = vpack.c.b16 %v286, %v282
      %291 = vrot.lane.b32.xlu0 %v287, 110
      %v292 = vpop.permute.xlu0 %291
      %293 = vrot.lane.b32.xlu0 %v288, 110
      %v294 = vpop.permute.xlu0 %293
      %295 = vrot.lane.b32.xlu0 %v289, 110
      %v296 = vpop.permute.xlu0 %295
      %297 = vrot.lane.b32.xlu0 %v290, 110
      %v298 = vpop.permute.xlu0 %297
      %vm299 = vcmask 900096
      %v300 = vsel %vm299, %v292, %v294
      %v301 = vsel %vm299, %v294, %v296
      %v302 = vsel %vm299, %v296, %v298
      %306 = vst [vmem:[#allocation2 + $0x48] sm:$0xff] %v300
      %307 = vst [vmem:[#allocation2 + $0x50] sm:$0xff] %v301
      %308 = vst [vmem:[#allocation2 + $0x58] sm:$0xff] %v302
      %v309 = vld [vmem:[%s165] sm:$0xff]
      %v310 = vld [vmem:[%s165 + $0x8] sm:$0xff]
      %v311 = vld [vmem:[%s165 + $0x10] sm:$0xff]
      %v312 = vld [vmem:[%s165 + $0x18] sm:$0xff]
      %v317 = vunpack.c.l.b16 %v309
      %v318 = vunpack.c.h.b16 %v309
      %v319 = vunpack.c.l.b16 %v310
      %v320 = vunpack.c.h.b16 %v310
      %v321 = vunpack.c.l.b16 %v311
      %v322 = vunpack.c.h.b16 %v311
      %v323 = vunpack.c.l.b16 %v312
      %v324 = vunpack.c.h.b16 %v312
      %v325 = vpack.c.b16 %v321, %v317
      %v326 = vpack.c.b16 %v322, %v318
      %v327 = vpack.c.b16 %v323, %v319
      %v328 = vpack.c.b16 %v324, %v320
      %329 = vrot.lane.b32.xlu0 %v325, 109
      %v330 = vpop.permute.xlu0 %329
      %331 = vrot.lane.b32.xlu0 %v326, 109
      %v332 = vpop.permute.xlu0 %331
      %333 = vrot.lane.b32.xlu0 %v327, 109
      %v334 = vpop.permute.xlu0 %333
      %335 = vrot.lane.b32.xlu0 %v328, 109
      %v336 = vpop.permute.xlu0 %335
      %vm337 = vcmask 891904
      %v338 = vsel %vm337, %v330, %v332
      %v339 = vsel %vm337, %v332, %v334
      %v340 = vsel %vm337, %v334, %v336
      %344 = vst [vmem:[#allocation2 + $0x60] sm:$0xff] %v338
      %345 = vst [vmem:[#allocation2 + $0x68] sm:$0xff] %v339
      %346 = vst [vmem:[#allocation2 + $0x70] sm:$0xff] %v340
      %v347 = vld [vmem:[%s165] sm:$0xff]
      %v348 = vld [vmem:[%s165 + $0x8] sm:$0xff]
      %v349 = vld [vmem:[%s165 + $0x10] sm:$0xff]
      %v350 = vld [vmem:[%s165 + $0x18] sm:$0xff]
      %v355 = vunpack.c.l.b16 %v347
      %v356 = vunpack.c.h.b16 %v347
      %v357 = vunpack.c.l.b16 %v348
      %v358 = vunpack.c.h.b16 %v348
      %v359 = vunpack.c.l.b16 %v349
      %v360 = vunpack.c.h.b16 %v349
      %v361 = vunpack.c.l.b16 %v350
      %v362 = vunpack.c.h.b16 %v350
      %v363 = vpack.c.b16 %v359, %v355
      %v364 = vpack.c.b16 %v360, %v356
      %v365 = vpack.c.b16 %v361, %v357
      %v366 = vpack.c.b16 %v362, %v358
      %367 = vrot.lane.b32.xlu0 %v363, 108
      %v368 = vpop.permute.xlu0 %367
      %369 = vrot.lane.b32.xlu0 %v364, 108
      %v370 = vpop.permute.xlu0 %369
      %371 = vrot.lane.b32.xlu0 %v365, 108
      %v372 = vpop.permute.xlu0 %371
      %373 = vrot.lane.b32.xlu0 %v366, 108
      %v374 = vpop.permute.xlu0 %373
      %vm375 = vcmask 883712
      %v376 = vsel %vm375, %v368, %v370
      %v377 = vsel %vm375, %v370, %v372
      %v378 = vsel %vm375, %v372, %v374
      %382 = vst [vmem:[#allocation2 + $0x78] sm:$0xff] %v376
      %383 = vst [vmem:[#allocation2 + $0x80] sm:$0xff] %v377
      %384 = vst [vmem:[#allocation2 + $0x88] sm:$0xff] %v378
      %v385 = vld [vmem:[%s165] sm:$0xff]
      %v386 = vld [vmem:[%s165 + $0x8] sm:$0xff]
      %v387 = vld [vmem:[%s165 + $0x10] sm:$0xff]
      %v388 = vld [vmem:[%s165 + $0x18] sm:$0xff]
      %v393 = vunpack.c.l.b16 %v385
      %v394 = vunpack.c.h.b16 %v385
      %v395 = vunpack.c.l.b16 %v386
      %v396 = vunpack.c.h.b16 %v386
      %v397 = vunpack.c.l.b16 %v387
      %v398 = vunpack.c.h.b16 %v387
      %v399 = vunpack.c.l.b16 %v388
      %v400 = vunpack.c.h.b16 %v388
      %v401 = vpack.c.b16 %v397, %v393
      %v402 = vpack.c.b16 %v398, %v394
      %v403 = vpack.c.b16 %v399, %v395
      %v404 = vpack.c.b16 %v400, %v396
      %405 = vrot.lane.b32.xlu0 %v401, 92
      %v406 = vpop.permute.xlu0 %405
      %407 = vrot.lane.b32.xlu0 %v402, 92
      %v408 = vpop.permute.xlu0 %407
      %409 = vrot.lane.b32.xlu0 %v403, 92
      %v410 = vpop.permute.xlu0 %409
      %411 = vrot.lane.b32.xlu0 %v404, 92
      %v412 = vpop.permute.xlu0 %411
      %vm413 = vcmask 752640
      %v414 = vsel %vm413, %v406, %v408
      %v415 = vsel %vm413, %v408, %v410
      %v416 = vsel %vm413, %v410, %v412
      %420 = vst [vmem:[#allocation2 + $0x90] sm:$0xff] %v414
      %421 = vst [vmem:[#allocation2 + $0x98] sm:$0xff] %v415
      %422 = vst [vmem:[#allocation2 + $0xa0] sm:$0xff] %v416
      %v423 = vld [vmem:[%s165] sm:$0xff]
      %v424 = vld [vmem:[%s165 + $0x8] sm:$0xff]
      %v425 = vld [vmem:[%s165 + $0x10] sm:$0xff]
      %v426 = vld [vmem:[%s165 + $0x18] sm:$0xff]
      %v431 = vunpack.c.l.b16 %v423
      %v432 = vunpack.c.h.b16 %v423
      %v433 = vunpack.c.l.b16 %v424
      %v434 = vunpack.c.h.b16 %v424
      %v435 = vunpack.c.l.b16 %v425
      %v436 = vunpack.c.h.b16 %v425
      %v437 = vunpack.c.l.b16 %v426
      %v438 = vunpack.c.h.b16 %v426
      %v439 = vpack.c.b16 %v435, %v431
      %v440 = vpack.c.b16 %v436, %v432
      %v441 = vpack.c.b16 %v437, %v433
      %v442 = vpack.c.b16 %v438, %v434
      %443 = vrot.lane.b32.xlu0 %v439, 91
      %v444 = vpop.permute.xlu0 %443
      %445 = vrot.lane.b32.xlu0 %v440, 91
      %v446 = vpop.permute.xlu0 %445
      %447 = vrot.lane.b32.xlu0 %v441, 91
      %v448 = vpop.permute.xlu0 %447
      %449 = vrot.lane.b32.xlu0 %v442, 91
      %v450 = vpop.permute.xlu0 %449
      %vm451 = vcmask 744448
      %v452 = vsel %vm451, %v444, %v446
      %v453 = vsel %vm451, %v446, %v448
      %v454 = vsel %vm451, %v448, %v450
      %458 = vst [vmem:[#allocation2 + $0xa8] sm:$0xff] %v452
      %459 = vst [vmem:[#allocation2 + $0xb0] sm:$0xff] %v453
      %460 = vst [vmem:[#allocation2 + $0xb8] sm:$0xff] %v454
      %v461 = vld [vmem:[%s165] sm:$0xff]
      %v462 = vld [vmem:[%s165 + $0x8] sm:$0xff]
      %v463 = vld [vmem:[%s165 + $0x10] sm:$0xff]
      %v464 = vld [vmem:[%s165 + $0x18] sm:$0xff]
      %v469 = vunpack.c.l.b16 %v461
      %v470 = vunpack.c.h.b16 %v461
      %v471 = vunpack.c.l.b16 %v462
      %v472 = vunpack.c.h.b16 %v462
      %v473 = vunpack.c.l.b16 %v463
      %v474 = vunpack.c.h.b16 %v463
      %v475 = vunpack.c.l.b16 %v464
      %v476 = vunpack.c.h.b16 %v464
      %v477 = vpack.c.b16 %v473, %v469
      %v478 = vpack.c.b16 %v474, %v470
      %v479 = vpack.c.b16 %v475, %v471
      %v480 = vpack.c.b16 %v476, %v472
      %481 = vrot.lane.b32.xlu0 %v477, 90
      %v482 = vpop.permute.xlu0 %481
      %483 = vrot.lane.b32.xlu0 %v478, 90
      %v484 = vpop.permute.xlu0 %483
      %485 = vrot.lane.b32.xlu0 %v479, 90
      %v486 = vpop.permute.xlu0 %485
      %487 = vrot.lane.b32.xlu0 %v480, 90
      %v488 = vpop.permute.xlu0 %487
      %vm489 = vcmask 736256
      %v490 = vsel %vm489, %v482, %v484
      %v491 = vsel %vm489, %v484, %v486
      %v492 = vsel %vm489, %v486, %v488
      %496 = vst [vmem:[#allocation2 + $0xc0] sm:$0xff] %v490
      %497 = vst [vmem:[#allocation2 + $0xc8] sm:$0xff] %v491
      %498 = vst [vmem:[#allocation2 + $0xd0] sm:$0xff] %v492
      %v499 = vld [vmem:[#allocation2] sm:$0xff]
      %v500 = vld [vmem:[#allocation2 + $0x8] sm:$0xff]
      %v501 = vld [vmem:[#allocation2 + $0x10] sm:$0xff]
      %v502 = vld [vmem:[#allocation2 + $0x18] sm:$0xff]
      %v503 = vld [vmem:[#allocation2 + $0x20] sm:$0xff]
      %v504 = vld [vmem:[#allocation2 + $0x28] sm:$0xff]
      %v505 = vld [vmem:[#allocation2 + $0x30] sm:$0xff]
      %v506 = vld [vmem:[#allocation2 + $0x38] sm:$0xff]
      %v507 = vld [vmem:[#allocation2 + $0x40] sm:$0xff]
      %v508 = vld [vmem:[#allocation2 + $0x48] sm:$0xff]
      %v509 = vld [vmem:[#allocation2 + $0x50] sm:$0xff]
      %v510 = vld [vmem:[#allocation2 + $0x58] sm:$0xff]
      %v511 = vld [vmem:[#allocation2 + $0x60] sm:$0xff]
      %v512 = vld [vmem:[#allocation2 + $0x68] sm:$0xff]
      %v513 = vld [vmem:[#allocation2 + $0x70] sm:$0xff]
      %v514 = vld [vmem:[#allocation2 + $0x78] sm:$0xff]
      %v515 = vld [vmem:[#allocation2 + $0x80] sm:$0xff]
      %v516 = vld [vmem:[#allocation2 + $0x88] sm:$0xff]
      %v517 = vld [vmem:[#allocation2 + $0x90] sm:$0xff]
      %v518 = vld [vmem:[#allocation2 + $0x98] sm:$0xff]
      %v519 = vld [vmem:[#allocation2 + $0xa0] sm:$0xff]
      %v520 = vld [vmem:[#allocation2 + $0xa8] sm:$0xff]
      %v521 = vld [vmem:[#allocation2 + $0xb0] sm:$0xff]
      %v522 = vld [vmem:[#allocation2 + $0xb8] sm:$0xff]
      %v523 = vld [vmem:[#allocation2 + $0xc0] sm:$0xff]
      %v524 = vld [vmem:[#allocation2 + $0xc8] sm:$0xff]
      %v525 = vld [vmem:[#allocation2 + $0xd0] sm:$0xff]
      %v526 = vld [vmem:[%s1] sm:$0xff]
      %v527 = vld [vmem:[%s1 + $0x8] sm:$0xff]
      %v528 = vld [vmem:[%s2] sm:$0xff]
      %v529 = vld [vmem:[%s2 + $0x8] sm:$0xff]
      %531 = vset.pattern.permute.xlu0 0
      %532 = vperm.xlu0 %531, %v528
      %v533 = vpop.permute.xlu0 %532
      %536 = vset.pattern.permute.xlu0 0
      %537 = vperm.xlu0 %536, %v529
      %v538 = vpop.permute.xlu0 %537
      %v542 = vunpack.c.l.b16 %v526
      %v543 = vunpack.c.h.b16 %v526
      %v544 = vunpack.c.l.b16 %v527
      %v545 = vunpack.c.h.b16 %v527
      %v546 = vpack.c.b16 %v544, %v542
      %v547 = vpack.c.b16 %v545, %v543
      %vm549 = vcmask 130048
      %v551 = vsel %vm549, %v547, 0
      %553 = vmatprep.subr.bf16.mxu0 %v500
      %554 = vmatpush1.bf16.msra.mxu0 %v499
      %555 = vmatprep.subr.bf16.mxu0 %v503
      %556 = vmatpush1.bf16.msra.mxu0 %v502
      %557 = vmatprep.subr.bf16.mxu0 %v506
      %558 = vmatpush1.bf16.msra.mxu0 %v505
      %559 = vmatprep.subr.bf16.mxu0 %v509
      %560 = vmatpush1.bf16.msra.mxu0 %v508
      %561 = vmatprep.subr.bf16.mxu0 %v512
      %562 = vmatpush1.bf16.msra.mxu0 %v511
      %563 = vmatprep.subr.bf16.mxu0 %v515
      %564 = vmatpush1.bf16.msra.mxu0 %v514
      %565 = vmatprep.subr.bf16.mxu0 %v518
      %566 = vmatpush1.bf16.msra.mxu0 %v517
      %567 = vmatprep.subr.bf16.mxu0 %v521
      %568 = vmatpush1.bf16.msra.mxu0 %v520
      %569 = vmatprep.subr.bf16.mxu0 %v524
      %570 = vmatpush1.bf16.msra.mxu0 %v523
      %571 = vmatprep.subr.bf16.mxu0 0
      %572 = vmatpush1.bf16.msra.mxu0 0
      %573 = vmatprep.subr.bf16.mxu0 0
      %574 = vmatpush1.bf16.msra.mxu0 0
      %575 = vmatprep.subr.bf16.mxu0 0
      %576 = vmatpush1.bf16.msra.mxu0 0
      %577 = vmatprep.subr.bf16.mxu0 0
      %578 = vmatpush1.bf16.msra.mxu0 0
      %579 = vmatprep.subr.bf16.mxu0 0
      %580 = vmatpush1.bf16.msra.mxu0 0
      %581 = vmatprep.subr.bf16.mxu0 0
      %582 = vmatpush1.bf16.msra.mxu0 0
      %583 = vmatprep.subr.bf16.mxu0 0
      %584 = vmatpush1.bf16.msra.mxu0 0
      %585 = vmatprep.mubr.bf16.mxu0 %v551
      %586 = vmatmul.mubr.bf16.gmra.mrb[0].mxu0 %v546
      %v587 = vpop.f32.mrb[0].mxu0
      %v588 = vadd.f32 %v533, %v587
      %v589 = vpop.f32.mrb[0].mxu0
      %v590 = vadd.f32 %v533, %v589
      %v591 = vpop.f32.mrb[0].mxu0
      %v592 = vadd.f32 %v538, %v591
      %v593 = vpop.f32.mrb[0].mxu0
      %v594 = vadd.f32 %v538, %v593
      %595 = vdwg.mxu0
      %596 = vmatprep.subr.bf16.mxu0 0
      %597 = vmatpush1.bf16.msra.mxu0 %v501
      %598 = vmatprep.subr.bf16.mxu0 0
      %599 = vmatpush1.bf16.msra.mxu0 %v504
      %600 = vmatprep.subr.bf16.mxu0 0
      %601 = vmatpush1.bf16.msra.mxu0 %v507
      %602 = vmatprep.subr.bf16.mxu0 0
      %603 = vmatpush1.bf16.msra.mxu0 %v510
      %604 = vmatprep.subr.bf16.mxu0 0
      %605 = vmatpush1.bf16.msra.mxu0 %v513
      %606 = vmatprep.subr.bf16.mxu0 0
      %607 = vmatpush1.bf16.msra.mxu0 %v516
      %608 = vmatprep.subr.bf16.mxu0 0
      %609 = vmatpush1.bf16.msra.mxu0 %v519
      %610 = vmatprep.subr.bf16.mxu0 0
      %611 = vmatpush1.bf16.msra.mxu0 %v522
      %612 = vmatprep.subr.bf16.mxu0 0
      %613 = vmatpush1.bf16.msra.mxu0 %v525
      %614 = vmatprep.subr.bf16.mxu0 0
      %615 = vmatpush1.bf16.msra.mxu0 0
      %616 = vmatprep.subr.bf16.mxu0 0
      %617 = vmatpush1.bf16.msra.mxu0 0
      %618 = vmatprep.subr.bf16.mxu0 0
      %619 = vmatpush1.bf16.msra.mxu0 0
      %620 = vmatprep.subr.bf16.mxu0 0
      %621 = vmatpush1.bf16.msra.mxu0 0
      %622 = vmatprep.subr.bf16.mxu0 0
      %623 = vmatpush1.bf16.msra.mxu0 0
      %624 = vmatprep.subr.bf16.mxu0 0
      %625 = vmatpush1.bf16.msra.mxu0 0
      %626 = vmatprep.subr.bf16.mxu0 0
      %627 = vmatpush1.bf16.msra.mxu0 0
      %628 = vmatprep.mubr.bf16.mxu0 %v551
      %629 = vmatmul.mubr.bf16.gmra.mrb[0].mxu0 %v546
      %v630 = vpop.f32.mrb[0].mxu0
      %v631 = vadd.f32 %v533, %v630
      %v632 = vpop.f32.mrb[0].mxu0
      %v633 = vpop.f32.mrb[0].mxu0
      %v634 = vadd.f32 %v538, %v633
      %v635 = vpop.f32.mrb[0].mxu0
      %636 = vdwg.mxu0
      %637 = vst [vmem:[%s170] sm:$0xff] %v588
      %638 = vst [vmem:[%s170 + $0x8] sm:$0xff] %v590
      %639 = vst [vmem:[%s170 + $0x10] sm:$0xff] %v631
      %640 = vst [vmem:[%s170 + $0x18] sm:$0xff] %v592
      %641 = vst [vmem:[%s170 + $0x20] sm:$0xff] %v594
      %642 = vst [vmem:[%s170 + $0x28] sm:$0xff] %v634
      %p643 = scmp.lt.s32.totalorder %s14, 1
      %s644 = scalar_select %p643, %s14, 1
      %s645 = smul.addr %s644, 6
      %s646 = smul.addr %s645, 8
      %s647 = scalar_lea.vmem %s3, %s646
      // Predicated region
      $region33: #{fwd.2} parent=31 // pred_check
        %p648 = pneg %p100
      $region34: #{fwd.2} parent=31 // pred_check_branch
        %650 = sbr.rel (%p648) target = $region36
      $region35: #{fwd.2} parent=31 // pred_region
        _
      $region36: #{fwd.2} parent=31 // pred_fallthru
        _
    $region32: #{fwd.2} parent=5 // pred_fallthru
      _
    %p651 = scmp.le.s32.totalorder 2, %s9
    // Predicated region
    $region37: #{fwd.2} parent=5 // pred_check
      %p652 = pneg %p651
    $region38: #{fwd.2} parent=5 // pred_check_branch
      %654 = sbr.rel (%p652) target = $region40
    $region39: #{fwd.2} parent=5 // pred_region
      %s655 = ssub.s32 %s9, 2
      // Predicated region
      $region41: #{fwd.2} parent=39 // pred_check
        %p656 = pneg %p106
      $region42: #{fwd.2} parent=39 // pred_check_branch
        %658 = sbr.rel (%p656) target = $region44
      $region43: #{fwd.2} parent=39 // pred_region
        %p659 = scmp.lt.s32.totalorder %s15, 1
        %s660 = scalar_select %p659, %s15, 1
        %s661 = smul.addr %s660, 6
        %s662 = smul.addr %s661, 8
        %s663 = scalar_lea.vmem %s3, %s662
      $region44: #{fwd.2} parent=39 // pred_fallthru
        _
    $region40: #{fwd.2} parent=5 // pred_fallthru
      _
  $region6: #{fwd.2} parent=0 // loop_footer
    %s13 = sadd.s32 1, %s9
  $region7: #{fwd.2} parent=0 // loop_footer_branch
    %8 = sbr.rel target = $region3
  $region8: #{fwd.2} parent=0 // loop_exit
    _

</llo_original>
